<compile_context>
chip_gen: v5e
topology: v5e:2x2
jax: 0.10.0
libtpu: 0.0.40
codegen_flags: <defaults>
</compile_context>

<pallas_src>
import functools

import jax
import jax.numpy as jnp
from jax import lax
from jax.experimental import pallas as pl
from jax.experimental.pallas import tpu as pltpu

_LANE = 128


# ---------------------------------------------------------------------------
# Kernels
# ---------------------------------------------------------------------------
def _rmsnorm_kernel(x_ref, g_ref, o_ref, *, eps):
    """Plain layout: x_ref (br, dim); g_ref (1, dim) = sqrt(dim)*(gamma+1)."""
    x = x_ref[...]
    xf = x.astype(jnp.float32)
    ss = jnp.sum(xf * xf, axis=-1, keepdims=True)            # f32 accumulation
    # x / max(||x||, eps) == x * rsqrt(max(ss, eps^2))  (rsqrt -> EUP slot)
    inv = lax.rsqrt(jnp.maximum(ss, eps * eps))               # (br, 1) f32
    # Second pass in the input dtype (bf16 VALU on v6e/v7x; no f32 temp tile).
    o_ref[...] = ((x * inv.astype(x.dtype)) * g_ref[...]).astype(o_ref.dtype)


def _rmsnorm_packed_kernel(x_ref, g_ref, m_ref, o_ref, *, eps):
    """Lane-dense layout: x_ref (br, k*dim); each row holds k original rows.

    m_ref is a constant (k*dim, k*dim) f32 block-diagonal 0/1 matrix;
    (x*x) @ M broadcasts each group's sum-of-squares to every lane of that
    group.  One tiny MXU matmul, no in-kernel reshapes or lane relayouts.
    """
    x = x_ref[...]
    xf = x.astype(jnp.float32)
    ss = jnp.dot(xf * xf, m_ref[...], preferred_element_type=jnp.float32)
    inv = lax.rsqrt(jnp.maximum(ss, eps * eps))               # (br, k*dim) f32
    o_ref[...] = ((x * inv.astype(x.dtype)) * g_ref[...]).astype(o_ref.dtype)


# ---------------------------------------------------------------------------
# Generation-aware sizing
# ---------------------------------------------------------------------------
def _tpu_vmem_bytes():
    """Per-core VMEM capacity; conservative (v7x-sized) fallback."""
    try:
        return int(pltpu.get_tpu_info().vmem_capacity_bytes)
    except Exception:
        return 64 * 1024 * 1024


def _sublane(itemsize):
    return max(8, 32 // max(1, itemsize))     # f32->8, bf16->16, int8/fp8->32


def _pick_block_rows(rows, row_bytes, itemsize, vmem_bytes):
    """Rows per block.

    Budget: 2 double-buffered input blocks + 2 double-buffered output blocks
    + ~2 blocks of intermediates  ->  block_bytes ~ vmem/12, capped at 8 MiB
    (v5e/v6e: 8 MiB blocks; v7x 64 MiB part: ~5 MiB blocks).  Also capped so
    the grid keeps >= ~8 steps (two warm TCs on v7x), and rounded to the
    sublane packing of the dtype.
    """
    sublane = _sublane(itemsize)
    target_bytes = min(8 * 1024 * 1024, max(1 * 1024 * 1024, vmem_bytes // 12))
    br = max(sublane, target_bytes // max(1, row_bytes))
    br = (br // sublane) * sublane
    # Keep the grid long enough for megacore sharding / pipeline overlap.
    min_steps = 8
    br_cap = -(-rows // min_steps)                            # ceil(rows/8)
    br_cap = ((br_cap + sublane - 1) // sublane) * sublane
    br = min(br, max(sublane, br_cap))
    rows_up = ((rows + sublane - 1) // sublane) * sublane
    return max(sublane, min(br, rows_up))


def _vmem_limit(block_bytes, vmem_bytes):
    """vmem_limit_bytes derived from the block size, capped at 75% physical."""
    want = 8 * block_bytes + (16 << 20)
    return int(min(vmem_bytes * 3 // 4, max(48 << 20, want)))


# ---------------------------------------------------------------------------
# Wrapper
# ---------------------------------------------------------------------------
def rmsnorm(x, gamma, *, eps=1e-12, block_rows=None):
    """RMSNorm forward. x: [..., dim], gamma: [dim]."""
    orig_shape = x.shape
    dim = orig_shape[-1]
    scale = float(dim) ** 0.5
    dtype = x.dtype
    itemsize = jnp.dtype(dtype).itemsize

    x2d = x.reshape(-1, dim)                  # free (bitcast) for contiguous x
    rows = x2d.shape[0]

    # Fold sqrt(dim) and the +1 into gamma on the host (tiny 1-D op); keep it
    # in the input dtype so the elementwise pass stays in-dtype.
    g1 = ((gamma.astype(jnp.float32) + 1.0) * scale).astype(dtype)

    vmem_bytes = _tpu_vmem_bytes()

    # Lane-dense packing when the feature dim is narrower than a lane row.
    k = 1
    if dim < _LANE and _LANE % dim == 0 and rows % (_LANE // dim) == 0:
        k = _LANE // dim

    if k > 1:
        kdim = k * dim
        prows = rows // k
        xp = x2d.reshape(prows, kdim)                         # free reshape
        gp = jnp.tile(g1.reshape(1, dim), (1, k))             # (1, k*dim)
        # Constant block-diagonal 0/1 matrix for the per-group segment sum.
        gi = jax.lax.broadcasted_iota(jnp.int32, (kdim, kdim), 0) // dim
        gj = jax.lax.broadcasted_iota(jnp.int32, (kdim, kdim), 1) // dim
        m = (gi == gj).astype(jnp.float32)

        br = block_rows
        if br is None:
            br = _pick_block_rows(prows, kdim * itemsize, itemsize, vmem_bytes)
        grid = (pl.cdiv(prows, br),)

        cost = pl.CostEstimate(
            flops=int(2 * prows * kdim * kdim + 3 * rows * dim),
            transcendentals=int(rows),
            bytes_accessed=int(2 * rows * dim * itemsize
                               + kdim * kdim * 4 + kdim * itemsize),
        )

        out = pl.pallas_call(
            functools.partial(_rmsnorm_packed_kernel, eps=float(eps)),
            out_shape=jax.ShapeDtypeStruct((prows, kdim), dtype),
            grid_spec=pltpu.PrefetchScalarGridSpec(
                num_scalar_prefetch=0,
                grid=grid,
                in_specs=[
                    pl.BlockSpec((br, kdim), lambda i: (i, 0)),
                    pl.BlockSpec((1, kdim), lambda i: (0, 0)),      # resident
                    pl.BlockSpec((kdim, kdim), lambda i: (0, 0)),   # resident
                ],
                out_specs=pl.BlockSpec((br, kdim), lambda i: (i, 0)),
            ),
            compiler_params=pltpu.CompilerParams(
                dimension_semantics=("parallel",),
                vmem_limit_bytes=_vmem_limit(br * kdim * itemsize, vmem_bytes),
            ),
            cost_estimate=cost,
        )(xp, gp, m)
        return out.reshape(orig_shape)

    # ---- Plain path (dim >= 128, or packing precondition not met) ----------
    g2d = g1.reshape(1, dim)
    br = block_rows
    if br is None:
        br = _pick_block_rows(rows, dim * itemsize, itemsize, vmem_bytes)
    grid = (pl.cdiv(rows, br),)

    cost = pl.CostEstimate(
        flops=int(3 * rows * dim),
        transcendentals=int(rows),
        bytes_accessed=int(2 * rows * dim * itemsize + dim * itemsize),
    )

    out = pl.pallas_call(
        functools.partial(_rmsnorm_kernel, eps=float(eps)),
        out_shape=jax.ShapeDtypeStruct((rows, dim), dtype),
        grid_spec=pltpu.PrefetchScalarGridSpec(
            num_scalar_prefetch=0,
            grid=grid,
            in_specs=[
                pl.BlockSpec((br, dim), lambda i: (i, 0)),
                pl.BlockSpec((1, dim), lambda i: (0, 0)),            # resident
            ],
            out_specs=pl.BlockSpec((br, dim), lambda i: (i, 0)),
        ),
        compiler_params=pltpu.CompilerParams(
            dimension_semantics=("parallel",),
            vmem_limit_bytes=_vmem_limit(br * dim * itemsize, vmem_bytes),
        ),
        cost_estimate=cost,
    )(x2d, g2d)
    return out.reshape(orig_shape)


# ---------------------------------------------------------------------------
# Reference + tests
# ---------------------------------------------------------------------------
def rmsnorm_ref(x, gamma, eps=1e-12):
    dim = x.shape[-1]
    scale = dim ** 0.5
    xf = x.astype(jnp.float32)
    norm = jnp.sqrt(jnp.sum(xf * xf, axis=-1, keepdims=True))
    y = xf / jnp.maximum(norm, eps) * scale * (gamma.astype(jnp.float32) + 1.0)
    return y.astype(x.dtype)


if __name__ == "__main__":
    key = jax.random.PRNGKey(0)
    k1, k2, k3, k4 = jax.random.split(key, 4)

    batch, seq, hidden = 2, 8, 32

    # Case 1: module init (gamma = zeros); rows divisible by 128//dim, so this
    # exercises the lane-dense packed path.
    x = jax.random.normal(k1, (batch, seq, hidden), dtype=jnp.float32)
    gamma0 = jnp.zeros((hidden,), dtype=jnp.float32)
    out = jax.block_until_ready(rmsnorm(x, gamma0))
    ref = rmsnorm_ref(x, gamma0)
    assert out.shape == x.shape
    assert jnp.allclose(out, ref, atol=1e-5, rtol=1e-5), "mismatch (gamma=0)"

    # Case 2: nonzero gamma + row count (15) that does NOT divide the packing
    # factor -> exercises the plain-layout fallback and a partial last block.
    x2 = jax.random.normal(k2, (3, 5, hidden), dtype=jnp.float32)
    gamma1 = 0.1 * jax.random.normal(k3, (hidden,), dtype=jnp.float32)
    out2 = jax.block_until_ready(rmsnorm(x2, gamma1))
    ref2 = rmsnorm_ref(x2, gamma1)
    assert out2.shape == x2.shape
    assert jnp.allclose(out2, ref2, atol=1e-5, rtol=1e-5), "mismatch (gamma!=0)"

    # Case 3: bf16 input -> f32 sum-of-squares, in-dtype second pass.
    x3 = jax.random.normal(k4, (batch, seq, hidden), dtype=jnp.bfloat16)
    out3 = jax.block_until_ready(rmsnorm(x3, gamma1))
    ref3 = rmsnorm_ref(x3, gamma1)
    assert out3.shape == x3.shape
    assert jnp.allclose(out3.astype(jnp.float32), ref3.astype(jnp.float32),
                        atol=1e-1, rtol=5e-2), "mismatch (bf16)"

    print("KERNEL_OK")
</pallas_src>

<mosaic_0001>
module attributes {stable_mosaic.version = 11 : i64} {
  func.func @_rmsnorm_packed_kernel(%arg0: i32, %arg1: memref<8x128xf32, #tpu.memory_space<vmem>>, %arg2: memref<1x128xf32, #tpu.memory_space<vmem>>, %arg3: memref<128x128xf32, #tpu.memory_space<vmem>>, %arg4: memref<8x128xf32, #tpu.memory_space<vmem>>) attributes {dimension_semantics = [#tpu.dimension_semantics<parallel>], iteration_bounds = array<i64: 1>, scalar_prefetch = 0 : i64, scratch_operands = 0 : i64, tpu.core_type = #tpu.core_type<tc>, window_params = [{transform_indices = @transform_0, window_bounds = array<i64: 8, 128>}, {pipeline_mode = #tpu.pipeline_mode<synchronous>, transform_indices = @transform_1, window_bounds = array<i64: 1, 128>}, {pipeline_mode = #tpu.pipeline_mode<synchronous>, transform_indices = @transform_2, window_bounds = array<i64: 128, 128>}, {transform_indices = @transform_3, window_bounds = array<i64: 8, 128>}]} {
    %c0 = arith.constant 0 : index
    %c0_0 = arith.constant 0 : index
    %0 = vector.load %arg1[%c0, %c0_0] : memref<8x128xf32, #tpu.memory_space<vmem>>, vector<8x128xf32>
    %1 = arith.mulf %0, %0 : vector<8x128xf32>
    %c0_1 = arith.constant 0 : index
    %c0_2 = arith.constant 0 : index
    %2 = vector.load %arg3[%c0_1, %c0_2] : memref<128x128xf32, #tpu.memory_space<vmem>>, vector<128x128xf32>
    %cst = arith.constant dense<0.000000e+00> : vector<8x128xf32>
    %3 = tpu.matmul %1, %2, %cst {dimension_numbers = #tpu.dot_dimension_numbers<[1], [0], [0], [1], [0, 0, 1, 1], [], []>} : vector<8x128xf32>, vector<128x128xf32>, vector<8x128xf32> -> vector<8x128xf32>
    %cst_3 = arith.constant 1.000000e-24 : f32
    %4 = vector.broadcast %cst_3 : f32 to vector<8x128xf32>
    %5 = arith.maximumf %3, %4 : vector<8x128xf32>
    %6 = math.rsqrt %5 : vector<8x128xf32>
    %7 = arith.mulf %0, %6 : vector<8x128xf32>
    %c0_4 = arith.constant 0 : index
    %c0_5 = arith.constant 0 : index
    %8 = vector.load %arg2[%c0_4, %c0_5] : memref<1x128xf32, #tpu.memory_space<vmem>>, vector<1x128xf32>
    %9 = vector.broadcast %8 : vector<1x128xf32> to vector<8x128xf32>
    %10 = arith.mulf %7, %9 : vector<8x128xf32>
    %c0_6 = arith.constant 0 : index
    %c0_7 = arith.constant 0 : index
    %11 = vector.load %arg4[%c0_6, %c0_7] : memref<8x128xf32, #tpu.memory_space<vmem>>, vector<8x128xf32>
    tpu.vector_store %arg4[%c0_6, %c0_7], %10 {strides = array<i32>} : memref<8x128xf32, #tpu.memory_space<vmem>>, vector<8x128xf32>,
    return
  }
  func.func @transform_0(%arg0: i32) -> (i32, i32) {
    %c0_i32 = arith.constant 0 : i32
    %c0_i32_0 = arith.constant 0 : i32
    return %arg0, %c0_i32 : i32, i32
  }
  func.func @transform_1(%arg0: i32) -> (i32, i32) {
    %c0_i32 = arith.constant 0 : i32
    %c0_i32_0 = arith.constant 0 : i32
    %c0_i32_1 = arith.constant 0 : i32
    return %c0_i32, %c0_i32_0 : i32, i32
  }
  func.func @transform_2(%arg0: i32) -> (i32, i32) {
    %c0_i32 = arith.constant 0 : i32
    %c0_i32_0 = arith.constant 0 : i32
    %c0_i32_1 = arith.constant 0 : i32
    return %c0_i32, %c0_i32_0 : i32, i32
  }
  func.func @transform_3(%arg0: i32) -> (i32, i32) {
    %c0_i32 = arith.constant 0 : i32
    %c0_i32_0 = arith.constant 0 : i32
    return %arg0, %c0_i32 : i32, i32
  }
}

</mosaic_0001>

<llo_original>
// kernel: tpu_custom_call.1
$region0: #{tpu_custom_call.1}
  #allocation0 [shape = 'u32[]', space=smem, size = 0x4, offset = 0x4, fixed_abs, tag = 'smem constant byte address 0x4 - core index']
  #allocation1 [shape = 'u32[72,128]{1,0:T(1,128)}', space=vmem, size = 0x9000, scoped, tag = 'internal scratch']
  %s0 = inlined_call_operand.hbm [shape: f32[4,128], index: 0, kind: input, shape index: {}]
  %s1 = inlined_call_operand.hbm [shape: f32[1,128], index: 1, kind: input, shape index: {}]
  %s2 = inlined_call_operand.hbm [shape: f32[128,128], index: 2, kind: input, shape index: {}]
  %s3 = inlined_call_operand.hbm [shape: f32[4,128], index: 3, kind: output, shape index: {}]
  %s4 = sld [smem:[#allocation0]]
  $region34: #{tpu_custom_call.1} parent=0
    _
  %s6 = ssub.s32 1, %s4
  %s7 = scalar_select 0, %s6, %s4
  $region1: #{tpu_custom_call.1} parent=0
    #allocation2 [shape = 'u8[4096]{0}', space=vmem, size = 0x1000, scoped, tag = 'input window, operand 0, single buffered']
    #allocation3 [shape = 's32[1]{0}', space=sflag, size = 0x4, scoped, tag = 'scoped memory for tpu_custom_call.1']
    #allocation4 [shape = 's32[1]{0}', space=sflag, size = 0x4, scoped, tag = 'scoped memory for tpu_custom_call.1']
    #allocation5 [shape = 'u8[512]{0}', space=vmem, size = 0x400, scoped, tag = 'input window, operand 1, single buffered']
    #allocation6 [shape = 's32[1]{0}', space=sflag, size = 0x4, scoped, tag = 'scoped memory for tpu_custom_call.1']
    #allocation7 [shape = 'u8[65536]{0}', space=vmem, size = 0x10000, scoped, tag = 'input window, operand 2, single buffered']
    #allocation8 [shape = 'u8[4096]{0}', space=vmem, size = 0x1000, scoped, tag = 'output window, operand 0, single buffered']
    %8 = vsyncpa [#allocation3], 0
    %9 = vsyncpa [#allocation6], 0
    %10 = vsyncpa [#allocation4], 0
    // Predicated region
    $region2: #{tpu_custom_call.1} parent=1 // pred_check
      _
    $region3: #{tpu_custom_call.1} parent=1 // pred_check_branch
      %12 = sbr.rel (0) target = $region5
    $region4: #{tpu_custom_call.1} parent=1 // pred_region
      %14 = vsyncadd [#allocation3], 64
      %s15 = sshll.u32 %s0, 4
      %s16 = int_to_ptr.hbm [resolvable:$true] %s15
      %s17 = sshll.u32 [#allocation2], 4
      %s18 = int_to_ptr.vmem [resolvable:$true] %s17
      %23 = dma.hbm_to_vmem [thread:$0]  %s16, 64, %s18, [#allocation3], 64, 64, 4
    $region5: #{tpu_custom_call.1} parent=1 // pred_fallthru
      _
    // Predicated region
    $region6: #{tpu_custom_call.1} parent=1 // pred_check
      _
    $region7: #{tpu_custom_call.1} parent=1 // pred_check_branch
      %25 = sbr.rel (0) target = $region9
    $region8: #{tpu_custom_call.1} parent=1 // pred_region
      %27 = vsyncadd [#allocation6], 0
      %s29 = sshll.u32 %s1, 4
      %s30 = int_to_ptr.hbm [resolvable:$true] %s29
      %s31 = sshll.u32 [#allocation5], 4
      %s32 = int_to_ptr.vmem [resolvable:$true] %s31
      %34 = dma.hbm_to_vmem [thread:$0]  %s30, 16, %s32, [#allocation6]
    $region9: #{tpu_custom_call.1} parent=1 // pred_fallthru
      _
    // Predicated region
    $region10: #{tpu_custom_call.1} parent=1 // pred_check
      _
    $region11: #{tpu_custom_call.1} parent=1 // pred_check_branch
      %36 = sbr.rel (0) target = $region13
    $region12: #{tpu_custom_call.1} parent=1 // pred_region
      %38 = vsyncadd [#allocation6], 0
      %s39 = sshll.u32 %s2, 4
      %s40 = int_to_ptr.hbm [resolvable:$true] %s39
      %s41 = sshll.u32 [#allocation7], 4
      %s42 = int_to_ptr.vmem [resolvable:$true] %s41
      %47 = dma.hbm_to_vmem [thread:$0]  %s40, 2048, %s42, [#allocation6], 128, 128, 8
    $region13: #{tpu_custom_call.1} parent=1 // pred_fallthru
      _
    // Predicated region
    $region14: #{tpu_custom_call.1} parent=1 // pred_check
      _
    $region15: #{tpu_custom_call.1} parent=1 // pred_check_branch
      %49 = sbr.rel (0) target = $region17
    $region16: #{tpu_custom_call.1} parent=1 // pred_region
      %51 = dma.done [#allocation3], 128
    $region17: #{tpu_custom_call.1} parent=1 // pred_fallthru
      _
    // Predicated region
    $region18: #{tpu_custom_call.1} parent=1 // pred_check
      _
    $region19: #{tpu_custom_call.1} parent=1 // pred_check_branch
      %53 = sbr.rel (0) target = $region21
    $region20: #{tpu_custom_call.1} parent=1 // pred_region
      %55 = dma.done [#allocation6], 16
    $region21: #{tpu_custom_call.1} parent=1 // pred_fallthru
      _
    // Predicated region
    $region22: #{tpu_custom_call.1} parent=1 // pred_check
      _
    $region23: #{tpu_custom_call.1} parent=1 // pred_check_branch
      %57 = sbr.rel (0) target = $region25
    $region24: #{tpu_custom_call.1} parent=1 // pred_region
      %59 = dma.done [#allocation6], 2048
    $region25: #{tpu_custom_call.1} parent=1 // pred_fallthru
      _
    %v60 = vld [vmem:[#allocation2] sm:$0xff]
    %v61 = vmul.f32 %v60, %v60
    %v62 = vld [vmem:[#allocation7] sm:$0xff]
    %v63 = vld [vmem:[#allocation7 + $0x8] sm:$0xff]
    %v64 = vld [vmem:[#allocation7 + $0x10] sm:$0xff]
    %v65 = vld [vmem:[#allocation7 + $0x18] sm:$0xff]
    %v66 = vld [vmem:[#allocation7 + $0x20] sm:$0xff]
    %v67 = vld [vmem:[#allocation7 + $0x28] sm:$0xff]
    %v68 = vld [vmem:[#allocation7 + $0x30] sm:$0xff]
    %v69 = vld [vmem:[#allocation7 + $0x38] sm:$0xff]
    %v70 = vld [vmem:[#allocation7 + $0x40] sm:$0xff]
    %v71 = vld [vmem:[#allocation7 + $0x48] sm:$0xff]
    %v72 = vld [vmem:[#allocation7 + $0x50] sm:$0xff]
    %v73 = vld [vmem:[#allocation7 + $0x58] sm:$0xff]
    %v74 = vld [vmem:[#allocation7 + $0x60] sm:$0xff]
    %v75 = vld [vmem:[#allocation7 + $0x68] sm:$0xff]
    %v76 = vld [vmem:[#allocation7 + $0x70] sm:$0xff]
    %v77 = vld [vmem:[#allocation7 + $0x78] sm:$0xff]
    %78 = vmatpush.msra.mxu0 %v77
    %79 = vmatpush.msra.mxu0 %v76
    %80 = vmatpush.msra.mxu0 %v75
    %81 = vmatpush.msra.mxu0 %v74
    %82 = vmatpush.msra.mxu0 %v73
    %83 = vmatpush.msra.mxu0 %v72
    %84 = vmatpush.msra.mxu0 %v71
    %85 = vmatpush.msra.mxu0 %v70
    %86 = vmatpush.msra.mxu0 %v69
    %87 = vmatpush.msra.mxu0 %v68
    %88 = vmatpush.msra.mxu0 %v67
    %89 = vmatpush.msra.mxu0 %v66
    %90 = vmatpush.msra.mxu0 %v65
    %91 = vmatpush.msra.mxu0 %v64
    %92 = vmatpush.msra.mxu0 %v63
    %93 = vmatpush.msra.mxu0 %v62
    %94 = vmatmul.f32.gmra.mxu0 %v61
    %v95 = vpop.f32.mrf.mxu0
    %v96 = vadd.f32 0.0, %v95
    %97 = vdwg.mxu0
    %v98 = vmax.f32 %v96, 1e-24
    %v99 = vrsqrt.pop %v98
    %v100 = vmul.f32 %v99, %v98
    %v101 = vmul.f32 %v100, %v99
    %v102 = vmul.f32 0.5, %v101
    %v103 = vsub.f32 1.5, %v102
    %v104 = vmul.f32 %v99, %v103
    %vm105 = vweird.f32 %v98
    %vm106 = vweird.f32 %v99
    %vm107 = vmor %vm105, %vm106
    %v108 = vsel %vm107, %v99, %v104
    %v109 = vmul.f32 %v60, %v108
    %v110 = vld [vmem:[#allocation5] sm:$0x1]
    %v112 = vperm.slane %v110, 0
    %v114 = vmul.f32 %v109, %v112
    %115 = vst [vmem:[#allocation8] sm:$0xff] %v114
    // Predicated region
    $region26: #{tpu_custom_call.1} parent=1 // pred_check
      _
    $region27: #{tpu_custom_call.1} parent=1 // pred_check_branch
      %117 = sbr.rel (0) target = $region29
    $region28: #{tpu_custom_call.1} parent=1 // pred_region
      %119 = vsyncadd [#allocation4], 64
      %s120 = sshll.u32 [#allocation8], 4
      %s121 = int_to_ptr.vmem [resolvable:$true] %s120
      %s122 = sshll.u32 %s3, 4
      %s123 = int_to_ptr.hbm [resolvable:$true] %s122
      %128 = dma.vmem_to_hbm [thread:$0]  %s121, 64, %s123, [#allocation4], 64, 64, 4
    $region29: #{tpu_custom_call.1} parent=1 // pred_fallthru
      _
    // Predicated region
    $region30: #{tpu_custom_call.1} parent=1 // pred_check
      _
    $region31: #{tpu_custom_call.1} parent=1 // pred_check_branch
      %130 = sbr.rel (0) target = $region33
    $region32: #{tpu_custom_call.1} parent=1 // pred_region
      %132 = dma.done [#allocation4], 128
    $region33: #{tpu_custom_call.1} parent=1 // pred_fallthru
      _
    %133 = vsyncpa [#allocation3], 1
    %134 = vsyncpa [#allocation6], 1
    %135 = vsyncpa [#allocation4], 1

</llo_original>
